<compile_context>
chip_gen: v7x
topology: tpu7x:2x2x1
jax: 0.10.0
libtpu: 0.0.40
codegen_flags: <defaults>
</compile_context>

<pallas_src>
import math

import jax
import jax.numpy as jnp
from jax.experimental import pallas as pl
from jax.experimental.pallas import tpu as pltpu

LN_EPS = 1e-5   # matches torch.nn.LayerNorm default
LANE = 128


def _layernorm(h, gamma, beta):
    # One-pass form: mean and mean-of-squares reduce independently (XLU),
    # rsqrt goes to the EUP slot (effectively free next to the matmuls).
    mu = jnp.mean(h, axis=-1, keepdims=True)
    ms = jnp.mean(h * h, axis=-1, keepdims=True)
    var = jnp.maximum(ms - mu * mu, 0.0)
    return (h - mu) * jax.lax.rsqrt(var + LN_EPS) * gamma + beta


def _mlp_kernel(x_ref,
                w1_ref, b1_ref, g1_ref, be1_ref,
                w2_ref, b2_ref, g2_ref, be2_ref,
                w3_ref, b3_ref,
                o_ref):
    # Matmuls run in bf16 on the MXU with f32 accumulation; everything else f32.
    x = x_ref[...].astype(jnp.bfloat16)

    h = jnp.dot(x, w1_ref[...], preferred_element_type=jnp.float32) + b1_ref[...]
    h = _layernorm(h, g1_ref[...], be1_ref[...])
    h = jnp.maximum(h, 0.0)

    h = jnp.dot(h.astype(jnp.bfloat16), w2_ref[...],
                preferred_element_type=jnp.float32) + b2_ref[...]
    h = _layernorm(h, g2_ref[...], be2_ref[...])
    h = jnp.maximum(h, 0.0)

    out = jnp.dot(h.astype(jnp.bfloat16), w3_ref[...],
                  preferred_element_type=jnp.float32) + b3_ref[...]
    o_ref[...] = out.astype(o_ref.dtype)


def init_params(key, in_dim, hidden_sizes=(256, 256), out_size=256, scale_ob=1.0):
    """Deterministic init mimicking tu.NormedLinear(scale=1.0) + nn.LayerNorm.

    Weights are stored transposed as (in_features, out_features) in bfloat16.
    1/scale_ob is folded into w1; w1's fan-in is zero-padded to a multiple of
    128 so the kernel's K dimension is lane-dense.
    """
    sizes = [in_dim] + list(hidden_sizes) + [out_size]
    params = {}
    keys = jax.random.split(key, len(sizes) - 1)
    for i, (fan_in, fan_out) in enumerate(zip(sizes[:-1], sizes[1:])):
        # nn.Linear default init, then row-normalize over fan-in (scale=1.0), bias=0
        bound = 1.0 / math.sqrt(fan_in)
        w = jax.random.uniform(keys[i], (fan_out, fan_in), jnp.float32, -bound, bound)
        w = w / jnp.linalg.norm(w, axis=1, keepdims=True)  # row norm == scale == 1.0
        w = w.T  # store as (in, out)
        if i == 0:
            w = w / scale_ob  # fold the x / scale_ob input scaling into w1
            k_pad = max(LANE, ((fan_in + LANE - 1) // LANE) * LANE)
            w = jnp.pad(w, ((0, k_pad - fan_in), (0, 0)))  # lane-dense K
        params[f"w{i+1}"] = w.astype(jnp.bfloat16)
        params[f"b{i+1}"] = jnp.zeros((1, fan_out), jnp.float32)
        if i < len(hidden_sizes):  # LayerNorm after each hidden linear
            params[f"g{i+1}"] = jnp.ones((1, fan_out), jnp.float32)
            params[f"be{i+1}"] = jnp.zeros((1, fan_out), jnp.float32)
    return params


def _choose_row_tile(bt):
    # Very large batches: 512-row tiles amortize per-step overhead further.
    # Large batches: 256 rows fills the 256-wide MXU M dim on v6e/v7x.
    # Small batches: split into ~2 tiles so the parallel grid axis has >=2
    # iterations (both v7x TensorCores busy). Tiles stay sublane-aligned (8).
    if bt >= 4096:
        return 512
    if bt >= 512:
        return 256
    half = (bt + 1) // 2
    return max(8, ((half + 7) // 8) * 8)


def fully_connected_encoder_forward(x, first, state_in, params, out_size=256):
    """x: (B, T, *inshape). Returns (codes (B, T, out_size), state_in)."""
    B, T = x.shape[0], x.shape[1]
    in_dim = 1
    for d in x.shape[2:]:
        in_dim *= d
    bt = B * T
    k_pad = params["w1"].shape[0]

    row_tile = _choose_row_tile(bt)
    bt_pad = ((bt + row_tile - 1) // row_tile) * row_tile

    x2 = jnp.reshape(x.astype(jnp.float32), (bt, in_dim))
    # Single pad: rows up to the grid multiple, features up to the lane-dense K.
    if bt_pad != bt or k_pad != in_dim:
        x2 = jnp.pad(x2, ((0, bt_pad - bt), (0, k_pad - in_dim)))

    h1 = params["w1"].shape[1]
    h2 = params["w2"].shape[1]
    grid = (bt_pad // row_tile,)

    def row_spec(feat):
        return pl.BlockSpec((row_tile, feat), lambda i: (i, 0))

    def full_spec(arr):
        # Constant-index full block: weights / biases / LN params stay resident
        # in VMEM across all grid steps (DMA'd once).
        return pl.BlockSpec(arr.shape, lambda i: (0, 0))

    flops = 2 * bt_pad * (k_pad * h1 + h1 * h2 + h2 * out_size)
    param_bytes = sum(int(p.size) * p.dtype.itemsize for p in params.values())
    bytes_accessed = int(x2.size) * 4 + param_bytes + bt_pad * out_size * 4

    out = pl.pallas_call(
        _mlp_kernel,
        out_shape=jax.ShapeDtypeStruct((bt_pad, out_size), jnp.float32),
        grid_spec=pltpu.PrefetchScalarGridSpec(
            num_scalar_prefetch=0,
            grid=grid,
            in_specs=[
                row_spec(k_pad),
                full_spec(params["w1"]), full_spec(params["b1"]),
                full_spec(params["g1"]), full_spec(params["be1"]),
                full_spec(params["w2"]), full_spec(params["b2"]),
                full_spec(params["g2"]), full_spec(params["be2"]),
                full_spec(params["w3"]), full_spec(params["b3"]),
            ],
            out_specs=row_spec(out_size),
        ),
        compiler_params=pltpu.CompilerParams(
            dimension_semantics=("parallel",)),
        cost_estimate=pl.CostEstimate(
            flops=flops,
            transcendentals=2 * bt_pad,
            bytes_accessed=bytes_accessed),
    )(x2,
      params["w1"], params["b1"], params["g1"], params["be1"],
      params["w2"], params["b2"], params["g2"], params["be2"],
      params["w3"], params["b3"])

    codes = jnp.reshape(out[:bt], (B, T, out_size))
    return codes, state_in


def _reference_forward(x, params, out_size=256, bf16_matmul=True):
    """Pure-JAX reference. bf16_matmul=True mirrors the kernel's MXU precision;
    False gives the original full-f32 module math (looser comparison)."""
    B, T = x.shape[0], x.shape[1]
    h = jnp.reshape(x.astype(jnp.float32), (B * T, -1))
    k_pad = params["w1"].shape[0]
    if k_pad != h.shape[1]:
        h = jnp.pad(h, ((0, 0), (0, k_pad - h.shape[1])))

    def dot(a, w):
        if bf16_matmul:
            return jnp.dot(a.astype(jnp.bfloat16), w.astype(jnp.bfloat16),
                           preferred_element_type=jnp.float32)
        return jnp.dot(a, w.astype(jnp.float32))

    h = dot(h, params["w1"]) + params["b1"]
    h = _layernorm(h, params["g1"], params["be1"])
    h = jnp.maximum(h, 0.0)
    h = dot(h, params["w2"]) + params["b2"]
    h = _layernorm(h, params["g2"], params["be2"])
    h = jnp.maximum(h, 0.0)
    h = dot(h, params["w3"]) + params["b3"]
    return jnp.reshape(h, (B, T, out_size))


if __name__ == "__main__":
    key = jax.random.PRNGKey(0)
    k_x, k_p = jax.random.split(key)

    B, T = 2, 8
    inshape = (32,)            # FullyConnectedEncoder(inshape=(32,))
    out_size = 256
    hidden_sizes = (256, 256)
    scale_ob = 1.0

    x = jax.random.normal(k_x, (B, T) + inshape, dtype=jnp.float32)
    first = jnp.zeros((B, T), jnp.float32)      # unused by forward, API pass-through
    state_in = jnp.zeros((B, 0), jnp.float32)   # initial_state(batchsize) -> zeros(B, 0)

    in_dim = 1
    for d in inshape:
        in_dim *= d
    params = init_params(k_p, in_dim, hidden_sizes, out_size, scale_ob=scale_ob)

    codes, state_out = fully_connected_encoder_forward(
        x, first, state_in, params, out_size=out_size)
    codes = jax.block_until_ready(codes)

    ref_bf16 = _reference_forward(x, params, out_size=out_size, bf16_matmul=True)
    ref_f32 = _reference_forward(x, params, out_size=out_size, bf16_matmul=False)

    assert codes.shape == (B, T, out_size)
    assert state_out.shape == (B, 0)
    # Tight check against a reference with matching (bf16 matmul, f32 acc) precision.
    assert jnp.allclose(codes, ref_bf16, atol=1e-4, rtol=1e-4)
    # Loose check against the original full-f32 module math.
    assert jnp.allclose(codes, ref_f32, atol=5e-2, rtol=5e-2)

    print("KERNEL_OK")
</pallas_src>

<mosaic_0001>
module attributes {stable_mosaic.version = 11 : i64} {
  func.func @_mlp_kernel(%arg0: i32, %arg1: memref<8x128xf32, #tpu.memory_space<vmem>>, %arg2: memref<128x256xbf16, #tpu.memory_space<vmem>>, %arg3: memref<1x256xf32, #tpu.memory_space<vmem>>, %arg4: memref<1x256xf32, #tpu.memory_space<vmem>>, %arg5: memref<1x256xf32, #tpu.memory_space<vmem>>, %arg6: memref<256x256xbf16, #tpu.memory_space<vmem>>, %arg7: memref<1x256xf32, #tpu.memory_space<vmem>>, %arg8: memref<1x256xf32, #tpu.memory_space<vmem>>, %arg9: memref<1x256xf32, #tpu.memory_space<vmem>>, %arg10: memref<256x256xbf16, #tpu.memory_space<vmem>>, %arg11: memref<1x256xf32, #tpu.memory_space<vmem>>, %arg12: memref<8x256xf32, #tpu.memory_space<vmem>>) attributes {dimension_semantics = [#tpu.dimension_semantics<parallel>], iteration_bounds = array<i64: 2>, scalar_prefetch = 0 : i64, scratch_operands = 0 : i64, tpu.core_type = #tpu.core_type<tc>, window_params = [{transform_indices = @transform_0, window_bounds = array<i64: 8, 128>}, {pipeline_mode = #tpu.pipeline_mode<synchronous>, transform_indices = @transform_1, window_bounds = array<i64: 128, 256>}, {pipeline_mode = #tpu.pipeline_mode<synchronous>, transform_indices = @transform_2, window_bounds = array<i64: 1, 256>}, {pipeline_mode = #tpu.pipeline_mode<synchronous>, transform_indices = @transform_3, window_bounds = array<i64: 1, 256>}, {pipeline_mode = #tpu.pipeline_mode<synchronous>, transform_indices = @transform_4, window_bounds = array<i64: 1, 256>}, {pipeline_mode = #tpu.pipeline_mode<synchronous>, transform_indices = @transform_5, window_bounds = array<i64: 256, 256>}, {pipeline_mode = #tpu.pipeline_mode<synchronous>, transform_indices = @transform_6, window_bounds = array<i64: 1, 256>}, {pipeline_mode = #tpu.pipeline_mode<synchronous>, transform_indices = @transform_7, window_bounds = array<i64: 1, 256>}, {pipeline_mode = #tpu.pipeline_mode<synchronous>, transform_indices = @transform_8, window_bounds = array<i64: 1, 256>}, {pipeline_mode = #tpu.pipeline_mode<synchronous>, transform_indices = @transform_9, window_bounds = array<i64: 256, 256>}, {pipeline_mode = #tpu.pipeline_mode<synchronous>, transform_indices = @transform_10, window_bounds = array<i64: 1, 256>}, {transform_indices = @transform_11, window_bounds = array<i64: 8, 256>}]} {
    %c0 = arith.constant 0 : index
    %c0_0 = arith.constant 0 : index
    %0 = vector.load %arg1[%c0, %c0_0] : memref<8x128xf32, #tpu.memory_space<vmem>>, vector<8x128xf32>
    %1 = arith.truncf %0 : vector<8x128xf32> to vector<8x128xbf16>
    %c0_1 = arith.constant 0 : index
    %c0_2 = arith.constant 0 : index
    %2 = vector.load %arg2[%c0_1, %c0_2] : memref<128x256xbf16, #tpu.memory_space<vmem>>, vector<128x256xbf16>
    %cst = arith.constant dense<0.000000e+00> : vector<8x256xf32>
    %3 = tpu.matmul %1, %2, %cst {dimension_numbers = #tpu.dot_dimension_numbers<[1], [0], [0], [1], [0, 0, 1, 1], [], []>} : vector<8x128xbf16>, vector<128x256xbf16>, vector<8x256xf32> -> vector<8x256xf32>
    %c0_3 = arith.constant 0 : index
    %c0_4 = arith.constant 0 : index
    %4 = vector.load %arg3[%c0_3, %c0_4] : memref<1x256xf32, #tpu.memory_space<vmem>>, vector<1x256xf32>
    %5 = vector.broadcast %4 : vector<1x256xf32> to vector<8x256xf32>
    %6 = arith.addf %3, %5 : vector<8x256xf32>
    %c0_5 = arith.constant 0 : index
    %c0_6 = arith.constant 0 : index
    %7 = vector.load %arg4[%c0_5, %c0_6] : memref<1x256xf32, #tpu.memory_space<vmem>>, vector<1x256xf32>
    %c0_7 = arith.constant 0 : index
    %c0_8 = arith.constant 0 : index
    %8 = vector.load %arg5[%c0_7, %c0_8] : memref<1x256xf32, #tpu.memory_space<vmem>>, vector<1x256xf32>
    %cst_9 = arith.constant dense<0.000000e+00> : vector<8xf32>
    %9 = vector.multi_reduction <add>, %6, %cst_9 [1] : vector<8x256xf32> to vector<8xf32>
    %10 = vector.shape_cast %9 : vector<8xf32> to vector<8x1xf32>
    %cst_10 = arith.constant 2.560000e+02 : f32
    %11 = vector.broadcast %cst_10 : f32 to vector<8x1xf32>
    %12 = arith.divf %10, %11 : vector<8x1xf32>
    %13 = arith.mulf %6, %6 : vector<8x256xf32>
    %cst_11 = arith.constant dense<0.000000e+00> : vector<8xf32>
    %14 = vector.multi_reduction <add>, %13, %cst_11 [1] : vector<8x256xf32> to vector<8xf32>
    %15 = vector.shape_cast %14 : vector<8xf32> to vector<8x1xf32>
    %cst_12 = arith.constant 2.560000e+02 : f32
    %16 = vector.broadcast %cst_12 : f32 to vector<8x1xf32>
    %17 = arith.divf %15, %16 : vector<8x1xf32>
    %18 = arith.mulf %12, %12 : vector<8x1xf32>
    %19 = arith.subf %17, %18 : vector<8x1xf32>
    %cst_13 = arith.constant 0.000000e+00 : f32
    %20 = vector.broadcast %cst_13 : f32 to vector<8x1xf32>
    %21 = arith.maximumf %19, %20 : vector<8x1xf32>
    %22 = vector.broadcast %12 : vector<8x1xf32> to vector<8x256xf32>
    %23 = arith.subf %6, %22 : vector<8x256xf32>
    %cst_14 = arith.constant 9.99999974E-6 : f32
    %24 = vector.broadcast %cst_14 : f32 to vector<8x1xf32>
    %25 = arith.addf %21, %24 : vector<8x1xf32>
    %26 = math.rsqrt %25 : vector<8x1xf32>
    %27 = vector.broadcast %26 : vector<8x1xf32> to vector<8x256xf32>
    %28 = arith.mulf %23, %27 : vector<8x256xf32>
    %29 = vector.broadcast %7 : vector<1x256xf32> to vector<8x256xf32>
    %30 = arith.mulf %28, %29 : vector<8x256xf32>
    %31 = vector.broadcast %8 : vector<1x256xf32> to vector<8x256xf32>
    %32 = arith.addf %30, %31 : vector<8x256xf32>
    %cst_15 = arith.constant 0.000000e+00 : f32
    %33 = vector.broadcast %cst_15 : f32 to vector<8x256xf32>
    %34 = arith.maximumf %32, %33 : vector<8x256xf32>
    %35 = arith.truncf %34 : vector<8x256xf32> to vector<8x256xbf16>
    %c0_16 = arith.constant 0 : index
    %c0_17 = arith.constant 0 : index
    %36 = vector.load %arg6[%c0_16, %c0_17] : memref<256x256xbf16, #tpu.memory_space<vmem>>, vector<256x256xbf16>
    %cst_18 = arith.constant dense<0.000000e+00> : vector<8x256xf32>
    %37 = tpu.matmul %35, %36, %cst_18 {dimension_numbers = #tpu.dot_dimension_numbers<[1], [0], [0], [1], [0, 0, 1, 1], [], []>} : vector<8x256xbf16>, vector<256x256xbf16>, vector<8x256xf32> -> vector<8x256xf32>
    %c0_19 = arith.constant 0 : index
    %c0_20 = arith.constant 0 : index
    %38 = vector.load %arg7[%c0_19, %c0_20] : memref<1x256xf32, #tpu.memory_space<vmem>>, vector<1x256xf32>
    %39 = vector.broadcast %38 : vector<1x256xf32> to vector<8x256xf32>
    %40 = arith.addf %37, %39 : vector<8x256xf32>
    %c0_21 = arith.constant 0 : index
    %c0_22 = arith.constant 0 : index
    %41 = vector.load %arg8[%c0_21, %c0_22] : memref<1x256xf32, #tpu.memory_space<vmem>>, vector<1x256xf32>
    %c0_23 = arith.constant 0 : index
    %c0_24 = arith.constant 0 : index
    %42 = vector.load %arg9[%c0_23, %c0_24] : memref<1x256xf32, #tpu.memory_space<vmem>>, vector<1x256xf32>
    %cst_25 = arith.constant dense<0.000000e+00> : vector<8xf32>
    %43 = vector.multi_reduction <add>, %40, %cst_25 [1] : vector<8x256xf32> to vector<8xf32>
    %44 = vector.shape_cast %43 : vector<8xf32> to vector<8x1xf32>
    %cst_26 = arith.constant 2.560000e+02 : f32
    %45 = vector.broadcast %cst_26 : f32 to vector<8x1xf32>
    %46 = arith.divf %44, %45 : vector<8x1xf32>
    %47 = arith.mulf %40, %40 : vector<8x256xf32>
    %cst_27 = arith.constant dense<0.000000e+00> : vector<8xf32>
    %48 = vector.multi_reduction <add>, %47, %cst_27 [1] : vector<8x256xf32> to vector<8xf32>
    %49 = vector.shape_cast %48 : vector<8xf32> to vector<8x1xf32>
    %cst_28 = arith.constant 2.560000e+02 : f32
    %50 = vector.broadcast %cst_28 : f32 to vector<8x1xf32>
    %51 = arith.divf %49, %50 : vector<8x1xf32>
    %52 = arith.mulf %46, %46 : vector<8x1xf32>
    %53 = arith.subf %51, %52 : vector<8x1xf32>
    %cst_29 = arith.constant 0.000000e+00 : f32
    %54 = vector.broadcast %cst_29 : f32 to vector<8x1xf32>
    %55 = arith.maximumf %53, %54 : vector<8x1xf32>
    %56 = vector.broadcast %46 : vector<8x1xf32> to vector<8x256xf32>
    %57 = arith.subf %40, %56 : vector<8x256xf32>
    %cst_30 = arith.constant 9.99999974E-6 : f32
    %58 = vector.broadcast %cst_30 : f32 to vector<8x1xf32>
    %59 = arith.addf %55, %58 : vector<8x1xf32>
    %60 = math.rsqrt %59 : vector<8x1xf32>
    %61 = vector.broadcast %60 : vector<8x1xf32> to vector<8x256xf32>
    %62 = arith.mulf %57, %61 : vector<8x256xf32>
    %63 = vector.broadcast %41 : vector<1x256xf32> to vector<8x256xf32>
    %64 = arith.mulf %62, %63 : vector<8x256xf32>
    %65 = vector.broadcast %42 : vector<1x256xf32> to vector<8x256xf32>
    %66 = arith.addf %64, %65 : vector<8x256xf32>
    %cst_31 = arith.constant 0.000000e+00 : f32
    %67 = vector.broadcast %cst_31 : f32 to vector<8x256xf32>
    %68 = arith.maximumf %66, %67 : vector<8x256xf32>
    %69 = arith.truncf %68 : vector<8x256xf32> to vector<8x256xbf16>
    %c0_32 = arith.constant 0 : index
    %c0_33 = arith.constant 0 : index
    %70 = vector.load %arg10[%c0_32, %c0_33] : memref<256x256xbf16, #tpu.memory_space<vmem>>, vector<256x256xbf16>
    %cst_34 = arith.constant dense<0.000000e+00> : vector<8x256xf32>
    %71 = tpu.matmul %69, %70, %cst_34 {dimension_numbers = #tpu.dot_dimension_numbers<[1], [0], [0], [1], [0, 0, 1, 1], [], []>} : vector<8x256xbf16>, vector<256x256xbf16>, vector<8x256xf32> -> vector<8x256xf32>
    %c0_35 = arith.constant 0 : index
    %c0_36 = arith.constant 0 : index
    %72 = vector.load %arg11[%c0_35, %c0_36] : memref<1x256xf32, #tpu.memory_space<vmem>>, vector<1x256xf32>
    %73 = vector.broadcast %72 : vector<1x256xf32> to vector<8x256xf32>
    %74 = arith.addf %71, %73 : vector<8x256xf32>
    %c0_37 = arith.constant 0 : index
    %c0_38 = arith.constant 0 : index
    %75 = vector.load %arg12[%c0_37, %c0_38] : memref<8x256xf32, #tpu.memory_space<vmem>>, vector<8x256xf32>
    tpu.vector_store %arg12[%c0_37, %c0_38], %74 {strides = array<i32>} : memref<8x256xf32, #tpu.memory_space<vmem>>, vector<8x256xf32>,
    return
  }
  func.func @transform_0(%arg0: i32) -> (i32, i32) {
    %c0_i32 = arith.constant 0 : i32
    %c0_i32_0 = arith.constant 0 : i32
    return %arg0, %c0_i32 : i32, i32
  }
  func.func @transform_1(%arg0: i32) -> (i32, i32) {
    %c0_i32 = arith.constant 0 : i32
    %c0_i32_0 = arith.constant 0 : i32
    %c0_i32_1 = arith.constant 0 : i32
    return %c0_i32, %c0_i32_0 : i32, i32
  }
  func.func @transform_2(%arg0: i32) -> (i32, i32) {
    %c0_i32 = arith.constant 0 : i32
    %c0_i32_0 = arith.constant 0 : i32
    %c0_i32_1 = arith.constant 0 : i32
    return %c0_i32, %c0_i32_0 : i32, i32
  }
  func.func @transform_3(%arg0: i32) -> (i32, i32) {
    %c0_i32 = arith.constant 0 : i32
    %c0_i32_0 = arith.constant 0 : i32
    %c0_i32_1 = arith.constant 0 : i32
    return %c0_i32, %c0_i32_0 : i32, i32
  }
  func.func @transform_4(%arg0: i32) -> (i32, i32) {
    %c0_i32 = arith.constant 0 : i32
    %c0_i32_0 = arith.constant 0 : i32
    %c0_i32_1 = arith.constant 0 : i32
    return %c0_i32, %c0_i32_0 : i32, i32
  }
  func.func @transform_5(%arg0: i32) -> (i32, i32) {
    %c0_i32 = arith.constant 0 : i32
    %c0_i32_0 = arith.constant 0 : i32
    %c0_i32_1 = arith.constant 0 : i32
    return %c0_i32, %c0_i32_0 : i32, i32
  }
  func.func @transform_6(%arg0: i32) -> (i32, i32) {
    %c0_i32 = arith.constant 0 : i32
    %c0_i32_0 = arith.constant 0 : i32
    %c0_i32_1 = arith.constant 0 : i32
    return %c0_i32, %c0_i32_0 : i32, i32
  }
  func.func @transform_7(%arg0: i32) -> (i32, i32) {
    %c0_i32 = arith.constant 0 : i32
    %c0_i32_0 = arith.constant 0 : i32
    %c0_i32_1 = arith.constant 0 : i32
    return %c0_i32, %c0_i32_0 : i32, i32
  }
  func.func @transform_8(%arg0: i32) -> (i32, i32) {
    %c0_i32 = arith.constant 0 : i32
    %c0_i32_0 = arith.constant 0 : i32
    %c0_i32_1 = arith.constant 0 : i32
    return %c0_i32, %c0_i32_0 : i32, i32
  }
  func.func @transform_9(%arg0: i32) -> (i32, i32) {
    %c0_i32 = arith.constant 0 : i32
    %c0_i32_0 = arith.constant 0 : i32
    %c0_i32_1 = arith.constant 0 : i32
    return %c0_i32, %c0_i32_0 : i32, i32
  }
  func.func @transform_10(%arg0: i32) -> (i32, i32) {
    %c0_i32 = arith.constant 0 : i32
    %c0_i32_0 = arith.constant 0 : i32
    %c0_i32_1 = arith.constant 0 : i32
    return %c0_i32, %c0_i32_0 : i32, i32
  }
  func.func @transform_11(%arg0: i32) -> (i32, i32) {
    %c0_i32 = arith.constant 0 : i32
    %c0_i32_0 = arith.constant 0 : i32
    return %arg0, %c0_i32 : i32, i32
  }
}

</mosaic_0001>

<llo_original>
// kernel: tpu_custom_call.1
$region0: #{tpu_custom_call.1}
  #allocation0 [shape = 'u32[]', space=smem, size = 0x4, offset = 0x4, fixed_abs, tag = 'smem constant byte address 0x4 - core index']
  #allocation1 [shape = 'u32[144,128]{1,0:T(1,128)}', space=vmem, size = 0x12000, scoped, tag = 'internal scratch']
  %s0 = inlined_call_operand.hbm [shape: f32[16,128], index: 0, kind: input, shape index: {}]
  %s1 = inlined_call_operand.hbm [shape: bf16[128,256], index: 1, kind: input, shape index: {}]
  %s2 = inlined_call_operand.vmem [shape: f32[1,256], index: 2, kind: input, shape index: {}]
  %s3 = inlined_call_operand.vmem [shape: f32[1,256], index: 3, kind: input, shape index: {}]
  %s4 = inlined_call_operand.vmem [shape: f32[1,256], index: 4, kind: input, shape index: {}]
  %s5 = inlined_call_operand.hbm [shape: bf16[256,256], index: 5, kind: input, shape index: {}]
  %s6 = inlined_call_operand.vmem [shape: f32[1,256], index: 6, kind: input, shape index: {}]
  %s7 = inlined_call_operand.vmem [shape: f32[1,256], index: 7, kind: input, shape index: {}]
  %s8 = inlined_call_operand.vmem [shape: f32[1,256], index: 8, kind: input, shape index: {}]
  %s9 = inlined_call_operand.hbm [shape: bf16[256,256], index: 9, kind: input, shape index: {}]
  %s10 = inlined_call_operand.vmem [shape: f32[1,256], index: 10, kind: input, shape index: {}]
  %s11 = inlined_call_operand.hbm [shape: f32[16,256], index: 11, kind: output, shape index: {}]
  %s12 = sld [smem:[#allocation0]]
  $region93: #{tpu_custom_call.1} parent=0
    _
  %s14 = ssub.s32 1, %s12
  %s15 = scalar_select 0, %s14, %s12
  $region1: #{tpu_custom_call.1} parent=0
    #allocation2 [shape = 'u8[8192]{0}', space=vmem, size = 0x2000, scoped, tag = 'input window, operand 0']
    #allocation3 [shape = 's32[2]{0}', space=sflag, size = 0x8, scoped, tag = 'scoped memory for tpu_custom_call.1']
    #allocation4 [shape = 's32[2]{0}', space=sflag, size = 0x8, scoped, tag = 'scoped memory for tpu_custom_call.1']
    #allocation5 [shape = 'u8[65536]{0}', space=vmem, size = 0x10000, scoped, tag = 'input window, operand 1, single buffered']
    #allocation6 [shape = 's32[1]{0}', space=sflag, size = 0x4, scoped, tag = 'scoped memory for tpu_custom_call.1']
    #allocation7 [shape = 'u8[131072]{0}', space=vmem, size = 0x20000, scoped, tag = 'input window, operand 5, single buffered']
    #allocation8 [shape = 'u8[131072]{0}', space=vmem, size = 0x20000, scoped, tag = 'input window, operand 9, single buffered']
    #allocation9 [shape = 's32[1]{0}', space=sflag, size = 0x4, scoped, tag = 'scoped memory for tpu_custom_call.1']
    #allocation10 [shape = 'u8[16384]{0}', space=vmem, size = 0x4000, scoped, tag = 'output window, operand 0']
    %16 = vsyncpa [#allocation3], 0
    %s17 = scalar_lea.sflag [#allocation3], 1
    %18 = vsyncpa %s17, 0
    %19 = vsyncpa [#allocation6], 0
    %20 = vsyncpa [#allocation9], 0
    %21 = vsyncpa [#allocation4], 0
    %s22 = scalar_lea.sflag [#allocation4], 1
    %23 = vsyncpa %s22, 0
    loop: start=0, step=1, limit=4
    $region2: #{tpu_custom_call.1} parent=1 // loop_pre_header
      _
    $region3: #{tpu_custom_call.1} parent=1 // loop_header
      %s25 = sphi 0, %s29
      %p26 = scmp.ge.s32.totalorder %s25, 4
      %s35 = sphi 0, %s37
      %s38 = sphi 0, %s35
      %s39 = sphi 0, %s38
      %s55 = sphi 0, %s39
      %s59 = sphi 0, %s59
      %s61 = sphi 0, %s59
      %s62 = sphi 0, %s61
      %s76 = sphi 0, %s62
      %s80 = sphi 0, %s80
      %s82 = sphi 0, %s80
      %s83 = sphi 0, %s82
      %s97 = sphi 0, %s83
      %s101 = sphi 0, %s101
      %s103 = sphi 0, %s101
      %s104 = sphi 0, %s103
      %s118 = sphi 0, %s104
      %s122 = sphi 0, %s122
      %s124 = sphi 0, %s122
      %s125 = sphi 0, %s124
      %s139 = sphi 0, %s125
      %s143 = sphi 0, %s143
      %s145 = sphi 0, %s143
      %s146 = sphi 0, %s145
      %s160 = sphi 0, %s146
      %s164 = sphi 0, %s164
      %s166 = sphi 0, %s164
      %s167 = sphi 0, %s166
      %s181 = sphi 0, %s167
      %s185 = sphi 0, %s185
      %s187 = sphi 0, %s185
      %s188 = sphi 0, %s187
      %s202 = sphi 0, %s188
      %s206 = sphi 0, %s206
      %s208 = sphi 0, %s206
      %s209 = sphi 0, %s208
      %s223 = sphi 0, %s209
      %s227 = sphi 0, %s227
      %s229 = sphi 0, %s227
      %s230 = sphi 0, %s229
      %s244 = sphi 0, %s230
      %s248 = sphi 0, %s248
      %s250 = sphi 0, %s248
      %s251 = sphi 0, %s250
      %s265 = sphi 0, %s251
      %s271 = sphi 0, %s273
      %s274 = sphi 0, %s271
      %s275 = sphi 0, %s274
      %s291 = sphi 0, %s275
    $region4: #{tpu_custom_call.1} parent=1 // loop_header_branch
      %28 = sbr.rel (%p26) target = $region8
    $region5: #{tpu_custom_call.1} parent=1 // loop_body
      %s30 = ssub.s32 %s25, 1
      %s31 = ssub.s32 %s25, 2
      %s32 = sadd.s32 %s25, 1
      %s33 = ssub.s32 %s25, %s32
      %p34 = scmp.eq.s32.totalorder %s33, 0
      %s36 = sadd.s32 %s35, 1
      %s37 = scalar_select %p34, %s35, %s36
      %p40 = pneg %p34
      %p41 = scmp.eq.s32.totalorder %s25, 1
      %p42 = por %p40, %p41
      %p43 = scmp.ne.s32.totalorder %s35, %s38
      %p44 = scmp.eq.s32.totalorder %s25, 0
      %p45 = por %p43, %p44
      %p46 = scmp.ne.s32.totalorder %s35, %s38
      %p47 = scmp.eq.s32.totalorder %s30, 1
      %p48 = por %p46, %p47
      %p49 = scmp.ne.s32.totalorder %s38, %s39
      %p50 = scmp.eq.s32.totalorder %s30, 0
      %p51 = por %p49, %p50
      %p52 = scmp.ne.s32.totalorder %s38, %s39
      %p53 = scmp.eq.s32.totalorder %s31, 1
      %p54 = por %p52, %p53
      %p56 = scmp.ne.s32.totalorder %s39, %s55
      %p57 = scmp.eq.s32.totalorder %s31, 0
      %p58 = por %p56, %p57
      %s60 = sadd.s32 %s59, 1
      %p63 = scmp.eq.s32.totalorder %s25, 1
      %p64 = scmp.ne.s32.totalorder %s59, %s61
      %p65 = scmp.eq.s32.totalorder %s25, 0
      %p66 = por %p64, %p65
      %p67 = scmp.ne.s32.totalorder %s59, %s61
      %p68 = scmp.eq.s32.totalorder %s30, 1
      %p69 = por %p67, %p68
      %p70 = scmp.ne.s32.totalorder %s61, %s62
      %p71 = scmp.eq.s32.totalorder %s30, 0
      %p72 = por %p70, %p71
      %p73 = scmp.ne.s32.totalorder %s61, %s62
      %p74 = scmp.eq.s32.totalorder %s31, 1
      %p75 = por %p73, %p74
      %p77 = scmp.ne.s32.totalorder %s62, %s76
      %p78 = scmp.eq.s32.totalorder %s31, 0
      %p79 = por %p77, %p78
      %s81 = sadd.s32 %s80, 1
      %p84 = scmp.eq.s32.totalorder %s25, 1
      %p85 = scmp.ne.s32.totalorder %s80, %s82
      %p86 = scmp.eq.s32.totalorder %s25, 0
      %p87 = por %p85, %p86
      %p88 = scmp.ne.s32.totalorder %s80, %s82
      %p89 = scmp.eq.s32.totalorder %s30, 1
      %p90 = por %p88, %p89
      %p91 = scmp.ne.s32.totalorder %s82, %s83
      %p92 = scmp.eq.s32.totalorder %s30, 0
      %p93 = por %p91, %p92
      %p94 = scmp.ne.s32.totalorder %s82, %s83
      %p95 = scmp.eq.s32.totalorder %s31, 1
      %p96 = por %p94, %p95
      %p98 = scmp.ne.s32.totalorder %s83, %s97
      %p99 = scmp.eq.s32.totalorder %s31, 0
      %p100 = por %p98, %p99
      %s102 = sadd.s32 %s101, 1
      %p105 = scmp.eq.s32.totalorder %s25, 1
      %p106 = scmp.ne.s32.totalorder %s101, %s103
      %p107 = scmp.eq.s32.totalorder %s25, 0
      %p108 = por %p106, %p107
      %p109 = scmp.ne.s32.totalorder %s101, %s103
      %p110 = scmp.eq.s32.totalorder %s30, 1
      %p111 = por %p109, %p110
      %p112 = scmp.ne.s32.totalorder %s103, %s104
      %p113 = scmp.eq.s32.totalorder %s30, 0
      %p114 = por %p112, %p113
      %p115 = scmp.ne.s32.totalorder %s103, %s104
      %p116 = scmp.eq.s32.totalorder %s31, 1
      %p117 = por %p115, %p116
      %p119 = scmp.ne.s32.totalorder %s104, %s118
      %p120 = scmp.eq.s32.totalorder %s31, 0
      %p121 = por %p119, %p120
      %s123 = sadd.s32 %s122, 1
      %p126 = scmp.eq.s32.totalorder %s25, 1
      %p127 = scmp.ne.s32.totalorder %s122, %s124
      %p128 = scmp.eq.s32.totalorder %s25, 0
      %p129 = por %p127, %p128
      %p130 = scmp.ne.s32.totalorder %s122, %s124
      %p131 = scmp.eq.s32.totalorder %s30, 1
      %p132 = por %p130, %p131
      %p133 = scmp.ne.s32.totalorder %s124, %s125
      %p134 = scmp.eq.s32.totalorder %s30, 0
      %p135 = por %p133, %p134
      %p136 = scmp.ne.s32.totalorder %s124, %s125
      %p137 = scmp.eq.s32.totalorder %s31, 1
      %p138 = por %p136, %p137
      %p140 = scmp.ne.s32.totalorder %s125, %s139
      %p141 = scmp.eq.s32.totalorder %s31, 0
      %p142 = por %p140, %p141
      %s144 = sadd.s32 %s143, 1
      %p147 = scmp.eq.s32.totalorder %s25, 1
      %p148 = scmp.ne.s32.totalorder %s143, %s145
      %p149 = scmp.eq.s32.totalorder %s25, 0
      %p150 = por %p148, %p149
      %p151 = scmp.ne.s32.totalorder %s143, %s145
      %p152 = scmp.eq.s32.totalorder %s30, 1
      %p153 = por %p151, %p152
      %p154 = scmp.ne.s32.totalorder %s145, %s146
      %p155 = scmp.eq.s32.totalorder %s30, 0
      %p156 = por %p154, %p155
      %p157 = scmp.ne.s32.totalorder %s145, %s146
      %p158 = scmp.eq.s32.totalorder %s31, 1
      %p159 = por %p157, %p158
      %p161 = scmp.ne.s32.totalorder %s146, %s160
      %p162 = scmp.eq.s32.totalorder %s31, 0
      %p163 = por %p161, %p162
      %s165 = sadd.s32 %s164, 1
      %p168 = scmp.eq.s32.totalorder %s25, 1
      %p169 = scmp.ne.s32.totalorder %s164, %s166
      %p170 = scmp.eq.s32.totalorder %s25, 0
      %p171 = por %p169, %p170
      %p172 = scmp.ne.s32.totalorder %s164, %s166
      %p173 = scmp.eq.s32.totalorder %s30, 1
      %p174 = por %p172, %p173
      %p175 = scmp.ne.s32.totalorder %s166, %s167
      %p176 = scmp.eq.s32.totalorder %s30, 0
      %p177 = por %p175, %p176
      %p178 = scmp.ne.s32.totalorder %s166, %s167
      %p179 = scmp.eq.s32.totalorder %s31, 1
      %p180 = por %p178, %p179
      %p182 = scmp.ne.s32.totalorder %s167, %s181
      %p183 = scmp.eq.s32.totalorder %s31, 0
      %p184 = por %p182, %p183
      %s186 = sadd.s32 %s185, 1
      %p189 = scmp.eq.s32.totalorder %s25, 1
      %p190 = scmp.ne.s32.totalorder %s185, %s187
      %p191 = scmp.eq.s32.totalorder %s25, 0
      %p192 = por %p190, %p191
      %p193 = scmp.ne.s32.totalorder %s185, %s187
      %p194 = scmp.eq.s32.totalorder %s30, 1
      %p195 = por %p193, %p194
      %p196 = scmp.ne.s32.totalorder %s187, %s188
      %p197 = scmp.eq.s32.totalorder %s30, 0
      %p198 = por %p196, %p197
      %p199 = scmp.ne.s32.totalorder %s187, %s188
      %p200 = scmp.eq.s32.totalorder %s31, 1
      %p201 = por %p199, %p200
      %p203 = scmp.ne.s32.totalorder %s188, %s202
      %p204 = scmp.eq.s32.totalorder %s31, 0
      %p205 = por %p203, %p204
      %s207 = sadd.s32 %s206, 1
      %p210 = scmp.eq.s32.totalorder %s25, 1
      %p211 = scmp.ne.s32.totalorder %s206, %s208
      %p212 = scmp.eq.s32.totalorder %s25, 0
      %p213 = por %p211, %p212
      %p214 = scmp.ne.s32.totalorder %s206, %s208
      %p215 = scmp.eq.s32.totalorder %s30, 1
      %p216 = por %p214, %p215
      %p217 = scmp.ne.s32.totalorder %s208, %s209
      %p218 = scmp.eq.s32.totalorder %s30, 0
      %p219 = por %p217, %p218
      %p220 = scmp.ne.s32.totalorder %s208, %s209
      %p221 = scmp.eq.s32.totalorder %s31, 1
      %p222 = por %p220, %p221
      %p224 = scmp.ne.s32.totalorder %s209, %s223
      %p225 = scmp.eq.s32.totalorder %s31, 0
      %p226 = por %p224, %p225
      %s228 = sadd.s32 %s227, 1
      %p231 = scmp.eq.s32.totalorder %s25, 1
      %p232 = scmp.ne.s32.totalorder %s227, %s229
      %p233 = scmp.eq.s32.totalorder %s25, 0
      %p234 = por %p232, %p233
      %p235 = scmp.ne.s32.totalorder %s227, %s229
      %p236 = scmp.eq.s32.totalorder %s30, 1
      %p237 = por %p235, %p236
      %p238 = scmp.ne.s32.totalorder %s229, %s230
      %p239 = scmp.eq.s32.totalorder %s30, 0
      %p240 = por %p238, %p239
      %p241 = scmp.ne.s32.totalorder %s229, %s230
      %p242 = scmp.eq.s32.totalorder %s31, 1
      %p243 = por %p241, %p242
      %p245 = scmp.ne.s32.totalorder %s230, %s244
      %p246 = scmp.eq.s32.totalorder %s31, 0
      %p247 = por %p245, %p246
      %s249 = sadd.s32 %s248, 1
      %p252 = scmp.eq.s32.totalorder %s25, 1
      %p253 = scmp.ne.s32.totalorder %s248, %s250
      %p254 = scmp.eq.s32.totalorder %s25, 0
      %p255 = por %p253, %p254
      %p256 = scmp.ne.s32.totalorder %s248, %s250
      %p257 = scmp.eq.s32.totalorder %s30, 1
      %p258 = por %p256, %p257
      %p259 = scmp.ne.s32.totalorder %s250, %s251
      %p260 = scmp.eq.s32.totalorder %s30, 0
      %p261 = por %p259, %p260
      %p262 = scmp.ne.s32.totalorder %s250, %s251
      %p263 = scmp.eq.s32.totalorder %s31, 1
      %p264 = por %p262, %p263
      %p266 = scmp.ne.s32.totalorder %s251, %s265
      %p267 = scmp.eq.s32.totalorder %s31, 0
      %p268 = por %p266, %p267
      %s269 = ssub.s32 %s25, %s32
      %p270 = scmp.eq.s32.totalorder %s269, 0
      %s272 = sadd.s32 %s271, 1
      %s273 = scalar_select %p270, %s271, %s272
      %p276 = pneg %p270
      %p277 = scmp.eq.s32.totalorder %s25, 1
      %p278 = por %p276, %p277
      %p279 = scmp.ne.s32.totalorder %s271, %s274
      %p280 = scmp.eq.s32.totalorder %s25, 0
      %p281 = por %p279, %p280
      %p282 = scmp.ne.s32.totalorder %s271, %s274
      %p283 = scmp.eq.s32.totalorder %s30, 1
      %p284 = por %p282, %p283
      %p285 = scmp.ne.s32.totalorder %s274, %s275
      %p286 = scmp.eq.s32.totalorder %s30, 0
      %p287 = por %p285, %p286
      %p288 = scmp.ne.s32.totalorder %s274, %s275
      %p289 = scmp.eq.s32.totalorder %s31, 1
      %p290 = por %p288, %p289
      %p292 = scmp.ne.s32.totalorder %s275, %s291
      %p293 = scmp.eq.s32.totalorder %s31, 0
      %p294 = por %p292, %p293
      %p295 = scmp.le.s32.totalorder 1, %s25
      %p296 = scmp.lt.s32.totalorder %s25, 3
      %p297 = pnand %p295, %p296
      %p298 = pneg %p297
      // Predicated region
      $region9: #{tpu_custom_call.1} parent=5 // pred_check
        _
      $region10: #{tpu_custom_call.1} parent=5 // pred_check_branch
        %300 = sbr.rel (%p297) target = $region12
      $region11: #{tpu_custom_call.1} parent=5 // pred_region
        %s301 = ssub.s32 %s25, 1
        // Predicated region
        $region13: #{tpu_custom_call.1} parent=11 // pred_check
          %p302 = pneg %p72
        $region14: #{tpu_custom_call.1} parent=11 // pred_check_branch
          %304 = sbr.rel (%p302) target = $region16
        $region15: #{tpu_custom_call.1} parent=11 // pred_region
          %s306 = ssub.s32 2048, 2048
          %307 = vsyncadd [#allocation6], %s306
          %s308 = sshll.u32 [#allocation5], 4
          %s309 = int_to_ptr.vmem [resolvable:$true] %s308
          %314 = dma.hbm_to_vmem [thread:$0]  %s1, 2048, %s309, [#allocation6], 128, 128, 8
        $region16: #{tpu_custom_call.1} parent=11 // pred_fallthru
          _
        // Predicated region
        $region17: #{tpu_custom_call.1} parent=11 // pred_check
          %p315 = pneg %p93
        $region18: #{tpu_custom_call.1} parent=11 // pred_check_branch
          %317 = sbr.rel (%p315) target = $region20
        $region19: #{tpu_custom_call.1} parent=11 // pred_region
          _
        $region20: #{tpu_custom_call.1} parent=11 // pred_fallthru
          _
        // Predicated region
        $region21: #{tpu_custom_call.1} parent=11 // pred_check
          %p318 = pneg %p114
        $region22: #{tpu_custom_call.1} parent=11 // pred_check_branch
          %320 = sbr.rel (%p318) target = $region24
        $region23: #{tpu_custom_call.1} parent=11 // pred_region
          _
        $region24: #{tpu_custom_call.1} parent=11 // pred_fallthru
          _
        // Predicated region
        $region25: #{tpu_custom_call.1} parent=11 // pred_check
          %p321 = pneg %p135
        $region26: #{tpu_custom_call.1} parent=11 // pred_check_branch
          %323 = sbr.rel (%p321) target = $region28
        $region27: #{tpu_custom_call.1} parent=11 // pred_region
          _
        $region28: #{tpu_custom_call.1} parent=11 // pred_fallthru
          _
        // Predicated region
        $region29: #{tpu_custom_call.1} parent=11 // pred_check
          %p324 = pneg %p156
        $region30: #{tpu_custom_call.1} parent=11 // pred_check_branch
          %326 = sbr.rel (%p324) target = $region32
        $region31: #{tpu_custom_call.1} parent=11 // pred_region
          %s328 = ssub.s32 4096, 4096
          %329 = vsyncadd [#allocation6], %s328
          %s330 = sshll.u32 [#allocation7], 4
          %s331 = int_to_ptr.vmem [resolvable:$true] %s330
          %336 = dma.hbm_to_vmem [thread:$0]  %s5, 4096, %s331, [#allocation6], 128, 128, 8
        $region32: #{tpu_custom_call.1} parent=11 // pred_fallthru
          _
        // Predicated region
        $region33: #{tpu_custom_call.1} parent=11 // pred_check
          %p337 = pneg %p177
        $region34: #{tpu_custom_call.1} parent=11 // pred_check_branch
          %339 = sbr.rel (%p337) target = $region36
        $region35: #{tpu_custom_call.1} parent=11 // pred_region
          _
        $region36: #{tpu_custom_call.1} parent=11 // pred_fallthru
          _
        // Predicated region
        $region37: #{tpu_custom_call.1} parent=11 // pred_check
          %p340 = pneg %p198
        $region38: #{tpu_custom_call.1} parent=11 // pred_check_branch
          %342 = sbr.rel (%p340) target = $region40
        $region39: #{tpu_custom_call.1} parent=11 // pred_region
          _
        $region40: #{tpu_custom_call.1} parent=11 // pred_fallthru
          _
        // Predicated region
        $region41: #{tpu_custom_call.1} parent=11 // pred_check
          %p343 = pneg %p219
        $region42: #{tpu_custom_call.1} parent=11 // pred_check_branch
          %345 = sbr.rel (%p343) target = $region44
        $region43: #{tpu_custom_call.1} parent=11 // pred_region
          _
        $region44: #{tpu_custom_call.1} parent=11 // pred_fallthru
          _
        // Predicated region
        $region45: #{tpu_custom_call.1} parent=11 // pred_check
          %p346 = pneg %p240
        $region46: #{tpu_custom_call.1} parent=11 // pred_check_branch
          %348 = sbr.rel (%p346) target = $region48
        $region47: #{tpu_custom_call.1} parent=11 // pred_region
          %s350 = ssub.s32 4096, 4096
          %351 = vsyncadd [#allocation9], %s350
          %s352 = sshll.u32 [#allocation8], 4
          %s353 = int_to_ptr.vmem [resolvable:$true] %s352
          %358 = dma.hbm_to_vmem [thread:$0]  %s9, 4096, %s353, [#allocation9], 128, 128, 8
        $region48: #{tpu_custom_call.1} parent=11 // pred_fallthru
          _
        // Predicated region
        $region49: #{tpu_custom_call.1} parent=11 // pred_check
          %p359 = pneg %p261
        $region50: #{tpu_custom_call.1} parent=11 // pred_check_branch
          %361 = sbr.rel (%p359) target = $region52
        $region51: #{tpu_custom_call.1} parent=11 // pred_region
          _
        $region52: #{tpu_custom_call.1} parent=11 // pred_fallthru
          _
      $region12: #{tpu_custom_call.1} parent=5 // pred_fallthru
        _
      %p362 = scmp.lt.s32.totalorder %s25, 2
      // Predicated region
      $region53: #{tpu_custom_call.1} parent=5 // pred_check
        %p363 = pneg %p362
      $region54: #{tpu_custom_call.1} parent=5 // pred_check_branch
        %365 = sbr.rel (%p363) target = $region56
      $region55: #{tpu_custom_call.1} parent=5 // pred_region
        // Predicated region
        $region57: #{tpu_custom_call.1} parent=55 // pred_check
          %p366 = pneg %p45
        $region58: #{tpu_custom_call.1} parent=55 // pred_check_branch
          %368 = sbr.rel (%p366) target = $region60
        $region59: #{tpu_custom_call.1} parent=55 // pred_region
          %s369 = sand.u32 %s35, 1
          %s370 = scalar_lea.sflag [#allocation3], %s369
          %s371 = sand.u32 %s35, 1
          %s372 = smul.addr %s371, 8
          %s373 = scalar_lea.vmem [#allocation2], %s372
          %s375 = ssub.s32 128, 128
          %376 = vsyncadd %s370, %s375
          %s377 = smul.addr %s25, 128
          %s378 = scalar_lea.hbm %s0, %s377
          %s380 = sshll.u32 %s373, 4
          %s381 = int_to_ptr.vmem [resolvable:$true] %s380
          %383 = dma.hbm_to_vmem [thread:$0]  %s378, 128, %s381, %s370
        $region60: #{tpu_custom_call.1} parent=55 // pred_fallthru
          _
      $region56: #{tpu_custom_call.1} parent=5 // pred_fallthru
        _
      %p384 = scmp.le.s32.totalorder 1, %s25
      %p385 = scmp.lt.s32.totalorder %s25, 3
      %p386 = pnand %p384, %p385
      %p387 = pneg %p386
      // Predicated region
      $region61: #{tpu_custom_call.1} parent=5 // pred_check
        _
      $region62: #{tpu_custom_call.1} parent=5 // pred_check_branch
        %389 = sbr.rel (%p386) target = $region64
      $region63: #{tpu_custom_call.1} parent=5 // pred_region
        %s390 = ssub.s32 %s25, 1
        %s391 = sand.u32 %s38, 1
        %s392 = scalar_lea.sflag [#allocation3], %s391
        %s393 = sand.u32 %s38, 1
        %s394 = smul.addr %s393, 8
        %s395 = scalar_lea.vmem [#allocation2], %s394
        // Predicated region
        $region65: #{tpu_custom_call.1} parent=63 // pred_check
          %p396 = pneg %p51
        $region66: #{tpu_custom_call.1} parent=63 // pred_check_branch
          %398 = sbr.rel (%p396) target = $region68
        $region67: #{tpu_custom_call.1} parent=63 // pred_region
          %399 = dma.done %s392, 128
        $region68: #{tpu_custom_call.1} parent=63 // pred_fallthru
          _
        // Predicated region
        $region69: #{tpu_custom_call.1} parent=63 // pred_check
          %p400 = pneg %p72
        $region70: #{tpu_custom_call.1} parent=63 // pred_check_branch
          %402 = sbr.rel (%p400) target = $region72
        $region71: #{tpu_custom_call.1} parent=63 // pred_region
          %403 = dma.done [#allocation6], 2048
        $region72: #{tpu_custom_call.1} parent=63 // pred_fallthru
          _
        // Predicated region
        $region73: #{tpu_custom_call.1} parent=63 // pred_check
          %p404 = pneg %p156
        $region74: #{tpu_custom_call.1} parent=63 // pred_check_branch
          %406 = sbr.rel (%p404) target = $region76
        $region75: #{tpu_custom_call.1} parent=63 // pred_region
          %407 = dma.done [#allocation6], 4096
        $region76: #{tpu_custom_call.1} parent=63 // pred_fallthru
          _
        // Predicated region
        $region77: #{tpu_custom_call.1} parent=63 // pred_check
          %p408 = pneg %p240
        $region78: #{tpu_custom_call.1} parent=63 // pred_check_branch
          %410 = sbr.rel (%p408) target = $region80
        $region79: #{tpu_custom_call.1} parent=63 // pred_region
          %411 = dma.done [#allocation9], 4096
        $region80: #{tpu_custom_call.1} parent=63 // pred_fallthru
          _
        %s412 = sand.u32 %s38, 1
        %s413 = scalar_lea.sflag [#allocation3], %s412
        %s414 = sand.u32 %s38, 1
        %s415 = smul.addr %s414, 8
        %s416 = scalar_lea.vmem [#allocation2], %s415
        %p417 = pneg %p51
        %p418 = pneg %p48
        %p419 = pneg %p72
        %p420 = pneg %p69
        %p421 = pneg %p93
        %p422 = pneg %p90
        %p423 = pneg %p114
        %p424 = pneg %p111
        %p425 = pneg %p135
        %p426 = pneg %p132
        %p427 = pneg %p156
        %p428 = pneg %p153
        %p429 = pneg %p177
        %p430 = pneg %p174
        %p431 = pneg %p198
        %p432 = pneg %p195
        %p433 = pneg %p219
        %p434 = pneg %p216
        %p435 = pneg %p240
        %p436 = pneg %p237
        %p437 = pneg %p261
        %p438 = pneg %p258
        %p439 = pneg %p287
        %p440 = pneg %p284
        %s441 = sand.u32 %s274, 1
        %s442 = scalar_lea.sflag [#allocation4], %s441
        %s443 = sand.u32 %s274, 1
        %s444 = smul.addr %s443, 16
        %s445 = scalar_lea.vmem [#allocation10], %s444
        %v447 = vld [vmem:[%s395] sm:$0xff]
        %v448 = vpack.c.bf16 %v447, %v447
        %v449 = vld [vmem:[#allocation5] sm:$0xff]
        %v450 = vld [vmem:[#allocation5 + $0x8] sm:$0xff]
        %v451 = vld [vmem:[#allocation5 + $0x10] sm:$0xff]
        %v452 = vld [vmem:[#allocation5 + $0x18] sm:$0xff]
        %v453 = vld [vmem:[#allocation5 + $0x20] sm:$0xff]
        %v454 = vld [vmem:[#allocation5 + $0x28] sm:$0xff]
        %v455 = vld [vmem:[#allocation5 + $0x30] sm:$0xff]
        %v456 = vld [vmem:[#allocation5 + $0x38] sm:$0xff]
        %v457 = vld [vmem:[#allocation5 + $0x40] sm:$0xff]
        %v458 = vld [vmem:[#allocation5 + $0x48] sm:$0xff]
        %v459 = vld [vmem:[#allocation5 + $0x50] sm:$0xff]
        %v460 = vld [vmem:[#allocation5 + $0x58] sm:$0xff]
        %v461 = vld [vmem:[#allocation5 + $0x60] sm:$0xff]
        %v462 = vld [vmem:[#allocation5 + $0x68] sm:$0xff]
        %v463 = vld [vmem:[#allocation5 + $0x70] sm:$0xff]
        %v464 = vld [vmem:[#allocation5 + $0x78] sm:$0xff]
        %v465 = vld [vmem:[%s2] sm:$0x3]
        %v467 = vlaneseq
        %v468 = vshrl.u32 %v467, 7
        %v469 = vsub.s32 0, %v468
        %v470 = vrot.slane %v465, %v469
        %v471 = vlaneseq
        %v472 = vshrl.u32 %v471, 7
        %v473 = vsub.s32 1, %v472
        %v474 = vrot.slane %v465, %v473
        %v493 = vunpack.c.l.b16 %v449
        %v494 = vunpack.c.h.b16 %v449
        %v495 = vunpack.c.l.b16 %v450
        %v496 = vunpack.c.h.b16 %v450
        %v497 = vunpack.c.l.b16 %v451
        %v498 = vunpack.c.h.b16 %v451
        %v499 = vunpack.c.l.b16 %v452
        %v500 = vunpack.c.h.b16 %v452
        %v501 = vunpack.c.l.b16 %v453
        %v502 = vunpack.c.h.b16 %v453
        %v503 = vunpack.c.l.b16 %v454
        %v504 = vunpack.c.h.b16 %v454
        %v505 = vunpack.c.l.b16 %v455
        %v506 = vunpack.c.h.b16 %v455
        %v507 = vunpack.c.l.b16 %v456
        %v508 = vunpack.c.h.b16 %v456
        %v509 = vunpack.c.l.b16 %v457
        %v510 = vunpack.c.h.b16 %v457
        %v511 = vunpack.c.l.b16 %v458
        %v512 = vunpack.c.h.b16 %v458
        %v513 = vunpack.c.l.b16 %v459
        %v514 = vunpack.c.h.b16 %v459
        %v515 = vunpack.c.l.b16 %v460
        %v516 = vunpack.c.h.b16 %v460
        %v517 = vunpack.c.l.b16 %v461
        %v518 = vunpack.c.h.b16 %v461
        %v519 = vunpack.c.l.b16 %v462
        %v520 = vunpack.c.h.b16 %v462
        %v521 = vunpack.c.l.b16 %v463
        %v522 = vunpack.c.h.b16 %v463
        %v523 = vunpack.c.l.b16 %v464
        %v524 = vunpack.c.h.b16 %v464
        %v525 = vpack.c.b16 %v495, %v493
        %v526 = vpack.c.b16 %v496, %v494
        %v527 = vpack.c.b16 %v499, %v497
        %v528 = vpack.c.b16 %v500, %v498
        %v529 = vpack.c.b16 %v503, %v501
        %v530 = vpack.c.b16 %v504, %v502
        %v531 = vpack.c.b16 %v507, %v505
        %v532 = vpack.c.b16 %v508, %v506
        %v533 = vpack.c.b16 %v511, %v509
        %v534 = vpack.c.b16 %v512, %v510
        %v535 = vpack.c.b16 %v515, %v513
        %v536 = vpack.c.b16 %v516, %v514
        %v537 = vpack.c.b16 %v519, %v517
        %v538 = vpack.c.b16 %v520, %v518
        %v539 = vpack.c.b16 %v523, %v521
        %v540 = vpack.c.b16 %v524, %v522
        %557 = vmatprep.subr.bf16.mxu0 %v526
        %558 = vmatpush1.bf16.msra.mxu0 %v525
        %559 = vmatprep.subr.bf16.mxu0 %v528
        %560 = vmatpush1.bf16.msra.mxu0 %v527
        %561 = vmatprep.subr.bf16.mxu0 %v530
        %562 = vmatpush1.bf16.msra.mxu0 %v529
        %563 = vmatprep.subr.bf16.mxu0 %v532
        %564 = vmatpush1.bf16.msra.mxu0 %v531
        %565 = vmatprep.subr.bf16.mxu0 %v534
        %566 = vmatpush1.bf16.msra.mxu0 %v533
        %567 = vmatprep.subr.bf16.mxu0 %v536
        %568 = vmatpush1.bf16.msra.mxu0 %v535
        %569 = vmatprep.subr.bf16.mxu0 %v538
        %570 = vmatpush1.bf16.msra.mxu0 %v537
        %571 = vmatprep.subr.bf16.mxu0 %v540
        %572 = vmatpush1.bf16.msra.mxu0 %v539
        %573 = vmatprep.subr.bf16.mxu0 0
        %574 = vmatpush1.bf16.msra.mxu0 0
        %575 = vmatprep.subr.bf16.mxu0 0
        %576 = vmatpush1.bf16.msra.mxu0 0
        %577 = vmatprep.subr.bf16.mxu0 0
        %578 = vmatpush1.bf16.msra.mxu0 0
        %579 = vmatprep.subr.bf16.mxu0 0
        %580 = vmatpush1.bf16.msra.mxu0 0
        %581 = vmatprep.subr.bf16.mxu0 0
        %582 = vmatpush1.bf16.msra.mxu0 0
        %583 = vmatprep.subr.bf16.mxu0 0
        %584 = vmatpush1.bf16.msra.mxu0 0
        %585 = vmatprep.subr.bf16.mxu0 0
        %586 = vmatpush1.bf16.msra.mxu0 0
        %587 = vmatprep.subr.bf16.mxu0 0
        %588 = vmatpush1.bf16.msra.mxu0 0
        %589 = vmatprep.mubr.bf16.mxu0 0
        %590 = vmatmul.mubr.bf16.gmra.mrb[0].mxu0 %v448
        %v591 = vpop.f32.mrb[0].mxu0
        %v592 = vadd.f32 %v470, %v591
        %v593 = vpop.f32.mrb[0].mxu0
        %v594 = vadd.f32 %v474, %v593
        %v595 = vpop.f32.mrb[0].mxu0
        %v596 = vpop.f32.mrb[0].mxu0
        %597 = vdwg.mxu0
        %v598 = vld [vmem:[%s3] sm:$0x3]
        %v599 = vld [vmem:[%s4] sm:$0x3]
        %v600 = vadd.f32 %v592, %v594
        %601 = vadd.xlane.f32.xlu0 %v600
        %v602 = vpop.xlane.xlu0 %601
        %v603 = vrcp.pop 256.0
        %v604 = vmul.f32 %v602, %v603
        %v605 = vmul.f32 %v592, %v592
        %v606 = vmul.f32 %v594, %v594
        %v607 = vadd.f32 %v605, %v606
        %608 = vadd.xlane.f32.xlu0 %v607
        %v609 = vpop.xlane.xlu0 %608
        %v610 = vmul.f32 %v609, %v603
        %v611 = vmul.f32 %v604, %v604
        %v612 = vsub.f32 %v610, %v611
        %v613 = vmax.f32 %v612, 0.0
        %v614 = vsub.f32 %v592, %v604
        %v615 = vsub.f32 %v594, %v604
        %v616 = vadd.f32 %v613, 1e-05
        %v617 = vrsqrt.pop %v616
        %v618 = vmul.f32 %v614, %v617
        %v619 = vmul.f32 %v615, %v617
        %v621 = vlaneseq
        %v622 = vshrl.u32 %v621, 7
        %v623 = vsub.s32 0, %v622
        %v624 = vrot.slane %v598, %v623
        %v625 = vlaneseq
        %v626 = vshrl.u32 %v625, 7
        %v627 = vsub.s32 1, %v626
        %v628 = vrot.slane %v598, %v627
        %v631 = vmul.f32 %v618, %v624
        %v632 = vmul.f32 %v619, %v628
        %v634 = vlaneseq
        %v635 = vshrl.u32 %v634, 7
        %v636 = vsub.s32 0, %v635
        %v637 = vrot.slane %v599, %v636
        %v638 = vlaneseq
        %v639 = vshrl.u32 %v638, 7
        %v640 = vsub.s32 1, %v639
        %v641 = vrot.slane %v599, %v640
        %v644 = vadd.f32 %v631, %v637
        %v645 = vadd.f32 %v632, %v641
        %v646 = vmax.f32 %v644, 0.0
        %v647 = vmax.f32 %v645, 0.0
        %v648 = vpack.c.bf16 %v646, %v646
        %v649 = vpack.c.bf16 %v647, %v647
        %v650 = vld [vmem:[#allocation7] sm:$0xff]
        %v651 = vld [vmem:[#allocation7 + $0x8] sm:$0xff]
        %v652 = vld [vmem:[#allocation7 + $0x10] sm:$0xff]
        %v653 = vld [vmem:[#allocation7 + $0x18] sm:$0xff]
        %v654 = vld [vmem:[#allocation7 + $0x20] sm:$0xff]
        %v655 = vld [vmem:[#allocation7 + $0x28] sm:$0xff]
        %v656 = vld [vmem:[#allocation7 + $0x30] sm:$0xff]
        %v657 = vld [vmem:[#allocation7 + $0x38] sm:$0xff]
        %v658 = vld [vmem:[#allocation7 + $0x40] sm:$0xff]
        %v659 = vld [vmem:[#allocation7 + $0x48] sm:$0xff]
        %v660 = vld [vmem:[#allocation7 + $0x50] sm:$0xff]
        %v661 = vld [vmem:[#allocation7 + $0x58] sm:$0xff]
        %v662 = vld [vmem:[#allocation7 + $0x60] sm:$0xff]
        %v663 = vld [vmem:[#allocation7 + $0x68] sm:$0xff]
        %v664 = vld [vmem:[#allocation7 + $0x70] sm:$0xff]
        %v665 = vld [vmem:[#allocation7 + $0x78] sm:$0xff]
        %v666 = vld [vmem:[#allocation7 + $0x80] sm:$0xff]
        %v667 = vld [vmem:[#allocation7 + $0x88] sm:$0xff]
        %v668 = vld [vmem:[#allocation7 + $0x90] sm:$0xff]
        %v669 = vld [vmem:[#allocation7 + $0x98] sm:$0xff]
        %v670 = vld [vmem:[#allocation7 + $0xa0] sm:$0xff]
        %v671 = vld [vmem:[#allocation7 + $0xa8] sm:$0xff]
        %v672 = vld [vmem:[#allocation7 + $0xb0] sm:$0xff]
        %v673 = vld [vmem:[#allocation7 + $0xb8] sm:$0xff]
        %v674 = vld [vmem:[#allocation7 + $0xc0] sm:$0xff]
        %v675 = vld [vmem:[#allocation7 + $0xc8] sm:$0xff]
        %v676 = vld [vmem:[#allocation7 + $0xd0] sm:$0xff]
        %v677 = vld [vmem:[#allocation7 + $0xd8] sm:$0xff]
        %v678 = vld [vmem:[#allocation7 + $0xe0] sm:$0xff]
        %v679 = vld [vmem:[#allocation7 + $0xe8] sm:$0xff]
        %v680 = vld [vmem:[#allocation7 + $0xf0] sm:$0xff]
        %v681 = vld [vmem:[#allocation7 + $0xf8] sm:$0xff]
        %v682 = vld [vmem:[%s6] sm:$0x3]
        %v684 = vlaneseq
        %v685 = vshrl.u32 %v684, 7
        %v686 = vsub.s32 0, %v685
        %v687 = vrot.slane %v682, %v686
        %v688 = vlaneseq
        %v689 = vshrl.u32 %v688, 7
        %v690 = vsub.s32 1, %v689
        %v691 = vrot.slane %v682, %v690
        %v726 = vunpack.c.l.b16 %v650
        %v727 = vunpack.c.h.b16 %v650
        %v728 = vunpack.c.l.b16 %v651
        %v729 = vunpack.c.h.b16 %v651
        %v730 = vunpack.c.l.b16 %v652
        %v731 = vunpack.c.h.b16 %v652
        %v732 = vunpack.c.l.b16 %v653
        %v733 = vunpack.c.h.b16 %v653
        %v734 = vunpack.c.l.b16 %v654
        %v735 = vunpack.c.h.b16 %v654
        %v736 = vunpack.c.l.b16 %v655
        %v737 = vunpack.c.h.b16 %v655
        %v738 = vunpack.c.l.b16 %v656
        %v739 = vunpack.c.h.b16 %v656
        %v740 = vunpack.c.l.b16 %v657
        %v741 = vunpack.c.h.b16 %v657
        %v742 = vunpack.c.l.b16 %v658
        %v743 = vunpack.c.h.b16 %v658
        %v744 = vunpack.c.l.b16 %v659
        %v745 = vunpack.c.h.b16 %v659
        %v746 = vunpack.c.l.b16 %v660
        %v747 = vunpack.c.h.b16 %v660
        %v748 = vunpack.c.l.b16 %v661
        %v749 = vunpack.c.h.b16 %v661
        %v750 = vunpack.c.l.b16 %v662
        %v751 = vunpack.c.h.b16 %v662
        %v752 = vunpack.c.l.b16 %v663
        %v753 = vunpack.c.h.b16 %v663
        %v754 = vunpack.c.l.b16 %v664
        %v755 = vunpack.c.h.b16 %v664
        %v756 = vunpack.c.l.b16 %v665
        %v757 = vunpack.c.h.b16 %v665
        %v758 = vunpack.c.l.b16 %v666
        %v759 = vunpack.c.h.b16 %v666
        %v760 = vunpack.c.l.b16 %v667
        %v761 = vunpack.c.h.b16 %v667
        %v762 = vunpack.c.l.b16 %v668
        %v763 = vunpack.c.h.b16 %v668
        %v764 = vunpack.c.l.b16 %v669
        %v765 = vunpack.c.h.b16 %v669
        %v766 = vunpack.c.l.b16 %v670
        %v767 = vunpack.c.h.b16 %v670
        %v768 = vunpack.c.l.b16 %v671
        %v769 = vunpack.c.h.b16 %v671
        %v770 = vunpack.c.l.b16 %v672
        %v771 = vunpack.c.h.b16 %v672
        %v772 = vunpack.c.l.b16 %v673
        %v773 = vunpack.c.h.b16 %v673
        %v774 = vunpack.c.l.b16 %v674
        %v775 = vunpack.c.h.b16 %v674
        %v776 = vunpack.c.l.b16 %v675
        %v777 = vunpack.c.h.b16 %v675
        %v778 = vunpack.c.l.b16 %v676
        %v779 = vunpack.c.h.b16 %v676
        %v780 = vunpack.c.l.b16 %v677
        %v781 = vunpack.c.h.b16 %v677
        %v782 = vunpack.c.l.b16 %v678
        %v783 = vunpack.c.h.b16 %v678
        %v784 = vunpack.c.l.b16 %v679
        %v785 = vunpack.c.h.b16 %v679
        %v786 = vunpack.c.l.b16 %v680
        %v787 = vunpack.c.h.b16 %v680
        %v788 = vunpack.c.l.b16 %v681
        %v789 = vunpack.c.h.b16 %v681
        %v790 = vpack.c.b16 %v728, %v726
        %v791 = vpack.c.b16 %v729, %v727
        %v792 = vpack.c.b16 %v732, %v730
        %v793 = vpack.c.b16 %v733, %v731
        %v794 = vpack.c.b16 %v736, %v734
        %v795 = vpack.c.b16 %v737, %v735
        %v796 = vpack.c.b16 %v740, %v738
        %v797 = vpack.c.b16 %v741, %v739
        %v798 = vpack.c.b16 %v744, %v742
        %v799 = vpack.c.b16 %v745, %v743
        %v800 = vpack.c.b16 %v748, %v746
        %v801 = vpack.c.b16 %v749, %v747
        %v802 = vpack.c.b16 %v752, %v750
        %v803 = vpack.c.b16 %v753, %v751
        %v804 = vpack.c.b16 %v756, %v754
        %v805 = vpack.c.b16 %v757, %v755
        %v806 = vpack.c.b16 %v760, %v758
        %v807 = vpack.c.b16 %v761, %v759
        %v808 = vpack.c.b16 %v764, %v762
        %v809 = vpack.c.b16 %v765, %v763
        %v810 = vpack.c.b16 %v768, %v766
        %v811 = vpack.c.b16 %v769, %v767
        %v812 = vpack.c.b16 %v772, %v770
        %v813 = vpack.c.b16 %v773, %v771
        %v814 = vpack.c.b16 %v776, %v774
        %v815 = vpack.c.b16 %v777, %v775
        %v816 = vpack.c.b16 %v780, %v778
        %v817 = vpack.c.b16 %v781, %v779
        %v818 = vpack.c.b16 %v784, %v782
        %v819 = vpack.c.b16 %v785, %v783
        %v820 = vpack.c.b16 %v788, %v786
        %v821 = vpack.c.b16 %v789, %v787
        %854 = vmatprep.subr.bf16.mxu0 %v791
        %855 = vmatpush1.bf16.msra.mxu0 %v790
        %856 = vmatprep.subr.bf16.mxu0 %v793
        %857 = vmatpush1.bf16.msra.mxu0 %v792
        %858 = vmatprep.subr.bf16.mxu0 %v795
        %859 = vmatpush1.bf16.msra.mxu0 %v794
        %860 = vmatprep.subr.bf16.mxu0 %v797
        %861 = vmatpush1.bf16.msra.mxu0 %v796
        %862 = vmatprep.subr.bf16.mxu0 %v799
        %863 = vmatpush1.bf16.msra.mxu0 %v798
        %864 = vmatprep.subr.bf16.mxu0 %v801
        %865 = vmatpush1.bf16.msra.mxu0 %v800
        %866 = vmatprep.subr.bf16.mxu0 %v803
        %867 = vmatpush1.bf16.msra.mxu0 %v802
        %868 = vmatprep.subr.bf16.mxu0 %v805
        %869 = vmatpush1.bf16.msra.mxu0 %v804
        %870 = vmatprep.subr.bf16.mxu0 %v807
        %871 = vmatpush1.bf16.msra.mxu0 %v806
        %872 = vmatprep.subr.bf16.mxu0 %v809
        %873 = vmatpush1.bf16.msra.mxu0 %v808
        %874 = vmatprep.subr.bf16.mxu0 %v811
        %875 = vmatpush1.bf16.msra.mxu0 %v810
        %876 = vmatprep.subr.bf16.mxu0 %v813
        %877 = vmatpush1.bf16.msra.mxu0 %v812
        %878 = vmatprep.subr.bf16.mxu0 %v815
        %879 = vmatpush1.bf16.msra.mxu0 %v814
        %880 = vmatprep.subr.bf16.mxu0 %v817
        %881 = vmatpush1.bf16.msra.mxu0 %v816
        %882 = vmatprep.subr.bf16.mxu0 %v819
        %883 = vmatpush1.bf16.msra.mxu0 %v818
        %884 = vmatprep.subr.bf16.mxu0 %v821
        %885 = vmatpush1.bf16.msra.mxu0 %v820
        %886 = vmatprep.mubr.bf16.mxu0 %v649
        %887 = vmatmul.mubr.bf16.gmra.mrb[0].mxu0 %v648
        %v888 = vpop.f32.mrb[0].mxu0
        %v889 = vadd.f32 %v687, %v888
        %v890 = vpop.f32.mrb[0].mxu0
        %v891 = vadd.f32 %v691, %v890
        %v892 = vpop.f32.mrb[0].mxu0
        %v893 = vpop.f32.mrb[0].mxu0
        %894 = vdwg.mxu0
        %v895 = vld [vmem:[%s7] sm:$0x3]
        %v896 = vld [vmem:[%s8] sm:$0x3]
        %v897 = vadd.f32 %v889, %v891
        %898 = vadd.xlane.f32.xlu0 %v897
        %v899 = vpop.xlane.xlu0 %898
        %v900 = vmul.f32 %v899, %v603
        %v901 = vmul.f32 %v889, %v889
        %v902 = vmul.f32 %v891, %v891
        %v903 = vadd.f32 %v901, %v902
        %904 = vadd.xlane.f32.xlu0 %v903
        %v905 = vpop.xlane.xlu0 %904
        %v906 = vmul.f32 %v905, %v603
        %v907 = vmul.f32 %v900, %v900
        %v908 = vsub.f32 %v906, %v907
        %v909 = vmax.f32 %v908, 0.0
        %v910 = vsub.f32 %v889, %v900
        %v911 = vsub.f32 %v891, %v900
        %v912 = vadd.f32 %v909, 1e-05
        %v913 = vrsqrt.pop %v912
        %v914 = vmul.f32 %v910, %v913
        %v915 = vmul.f32 %v911, %v913
        %v917 = vlaneseq
        %v918 = vshrl.u32 %v917, 7
        %v919 = vsub.s32 0, %v918
        %v920 = vrot.slane %v895, %v919
        %v921 = vlaneseq
        %v922 = vshrl.u32 %v921, 7
        %v923 = vsub.s32 1, %v922
        %v924 = vrot.slane %v895, %v923
        %v927 = vmul.f32 %v914, %v920
        %v928 = vmul.f32 %v915, %v924
        %v930 = vlaneseq
        %v931 = vshrl.u32 %v930, 7
        %v932 = vsub.s32 0, %v931
        %v933 = vrot.slane %v896, %v932
        %v934 = vlaneseq
        %v935 = vshrl.u32 %v934, 7
        %v936 = vsub.s32 1, %v935
        %v937 = vrot.slane %v896, %v936
        %v940 = vadd.f32 %v927, %v933
        %v941 = vadd.f32 %v928, %v937
        %v942 = vmax.f32 %v940, 0.0
        %v943 = vmax.f32 %v941, 0.0
        %v944 = vpack.c.bf16 %v942, %v942
        %v945 = vpack.c.bf16 %v943, %v943
        %v946 = vld [vmem:[#allocation8] sm:$0xff]
        %v947 = vld [vmem:[#allocation8 + $0x8] sm:$0xff]
        %v948 = vld [vmem:[#allocation8 + $0x10] sm:$0xff]
        %v949 = vld [vmem:[#allocation8 + $0x18] sm:$0xff]
        %v950 = vld [vmem:[#allocation8 + $0x20] sm:$0xff]
        %v951 = vld [vmem:[#allocation8 + $0x28] sm:$0xff]
        %v952 = vld [vmem:[#allocation8 + $0x30] sm:$0xff]
        %v953 = vld [vmem:[#allocation8 + $0x38] sm:$0xff]
        %v954 = vld [vmem:[#allocation8 + $0x40] sm:$0xff]
        %v955 = vld [vmem:[#allocation8 + $0x48] sm:$0xff]
        %v956 = vld [vmem:[#allocation8 + $0x50] sm:$0xff]
        %v957 = vld [vmem:[#allocation8 + $0x58] sm:$0xff]
        %v958 = vld [vmem:[#allocation8 + $0x60] sm:$0xff]
        %v959 = vld [vmem:[#allocation8 + $0x68] sm:$0xff]
        %v960 = vld [vmem:[#allocation8 + $0x70] sm:$0xff]
        %v961 = vld [vmem:[#allocation8 + $0x78] sm:$0xff]
        %v962 = vld [vmem:[#allocation8 + $0x80] sm:$0xff]
        %v963 = vld [vmem:[#allocation8 + $0x88] sm:$0xff]
        %v964 = vld [vmem:[#allocation8 + $0x90] sm:$0xff]
        %v965 = vld [vmem:[#allocation8 + $0x98] sm:$0xff]
        %v966 = vld [vmem:[#allocation8 + $0xa0] sm:$0xff]
        %v967 = vld [vmem:[#allocation8 + $0xa8] sm:$0xff]
        %v968 = vld [vmem:[#allocation8 + $0xb0] sm:$0xff]
        %v969 = vld [vmem:[#allocation8 + $0xb8] sm:$0xff]
        %v970 = vld [vmem:[#allocation8 + $0xc0] sm:$0xff]
        %v971 = vld [vmem:[#allocation8 + $0xc8] sm:$0xff]
        %v972 = vld [vmem:[#allocation8 + $0xd0] sm:$0xff]
        %v973 = vld [vmem:[#allocation8 + $0xd8] sm:$0xff]
        %v974 = vld [vmem:[#allocation8 + $0xe0] sm:$0xff]
        %v975 = vld [vmem:[#allocation8 + $0xe8] sm:$0xff]
        %v976 = vld [vmem:[#allocation8 + $0xf0] sm:$0xff]
        %v977 = vld [vmem:[#allocation8 + $0xf8] sm:$0xff]
        %v978 = vld [vmem:[%s10] sm:$0x3]
        %v980 = vlaneseq
        %v981 = vshrl.u32 %v980, 7
        %v982 = vsub.s32 0, %v981
        %v983 = vrot.slane %v978, %v982
        %v984 = vlaneseq
        %v985 = vshrl.u32 %v984, 7
        %v986 = vsub.s32 1, %v985
        %v987 = vrot.slane %v978, %v986
        %v1022 = vunpack.c.l.b16 %v946
        %v1023 = vunpack.c.h.b16 %v946
        %v1024 = vunpack.c.l.b16 %v947
        %v1025 = vunpack.c.h.b16 %v947
        %v1026 = vunpack.c.l.b16 %v948
        %v1027 = vunpack.c.h.b16 %v948
        %v1028 = vunpack.c.l.b16 %v949
        %v1029 = vunpack.c.h.b16 %v949
        %v1030 = vunpack.c.l.b16 %v950
        %v1031 = vunpack.c.h.b16 %v950
        %v1032 = vunpack.c.l.b16 %v951
        %v1033 = vunpack.c.h.b16 %v951
        %v1034 = vunpack.c.l.b16 %v952
        %v1035 = vunpack.c.h.b16 %v952
        %v1036 = vunpack.c.l.b16 %v953
        %v1037 = vunpack.c.h.b16 %v953
        %v1038 = vunpack.c.l.b16 %v954
        %v1039 = vunpack.c.h.b16 %v954
        %v1040 = vunpack.c.l.b16 %v955
        %v1041 = vunpack.c.h.b16 %v955
        %v1042 = vunpack.c.l.b16 %v956
        %v1043 = vunpack.c.h.b16 %v956
        %v1044 = vunpack.c.l.b16 %v957
        %v1045 = vunpack.c.h.b16 %v957
        %v1046 = vunpack.c.l.b16 %v958
        %v1047 = vunpack.c.h.b16 %v958
        %v1048 = vunpack.c.l.b16 %v959
        %v1049 = vunpack.c.h.b16 %v959
        %v1050 = vunpack.c.l.b16 %v960
        %v1051 = vunpack.c.h.b16 %v960
        %v1052 = vunpack.c.l.b16 %v961
        %v1053 = vunpack.c.h.b16 %v961
        %v1054 = vunpack.c.l.b16 %v962
        %v1055 = vunpack.c.h.b16 %v962
        %v1056 = vunpack.c.l.b16 %v963
        %v1057 = vunpack.c.h.b16 %v963
        %v1058 = vunpack.c.l.b16 %v964
        %v1059 = vunpack.c.h.b16 %v964
        %v1060 = vunpack.c.l.b16 %v965
        %v1061 = vunpack.c.h.b16 %v965
        %v1062 = vunpack.c.l.b16 %v966
        %v1063 = vunpack.c.h.b16 %v966
        %v1064 = vunpack.c.l.b16 %v967
        %v1065 = vunpack.c.h.b16 %v967
        %v1066 = vunpack.c.l.b16 %v968
        %v1067 = vunpack.c.h.b16 %v968
        %v1068 = vunpack.c.l.b16 %v969
        %v1069 = vunpack.c.h.b16 %v969
        %v1070 = vunpack.c.l.b16 %v970
        %v1071 = vunpack.c.h.b16 %v970
        %v1072 = vunpack.c.l.b16 %v971
        %v1073 = vunpack.c.h.b16 %v971
        %v1074 = vunpack.c.l.b16 %v972
        %v1075 = vunpack.c.h.b16 %v972
        %v1076 = vunpack.c.l.b16 %v973
        %v1077 = vunpack.c.h.b16 %v973
        %v1078 = vunpack.c.l.b16 %v974
        %v1079 = vunpack.c.h.b16 %v974
        %v1080 = vunpack.c.l.b16 %v975
        %v1081 = vunpack.c.h.b16 %v975
        %v1082 = vunpack.c.l.b16 %v976
        %v1083 = vunpack.c.h.b16 %v976
        %v1084 = vunpack.c.l.b16 %v977
        %v1085 = vunpack.c.h.b16 %v977
        %v1086 = vpack.c.b16 %v1024, %v1022
        %v1087 = vpack.c.b16 %v1025, %v1023
        %v1088 = vpack.c.b16 %v1028, %v1026
        %v1089 = vpack.c.b16 %v1029, %v1027
        %v1090 = vpack.c.b16 %v1032, %v1030
        %v1091 = vpack.c.b16 %v1033, %v1031
        %v1092 = vpack.c.b16 %v1036, %v1034
        %v1093 = vpack.c.b16 %v1037, %v1035
        %v1094 = vpack.c.b16 %v1040, %v1038
        %v1095 = vpack.c.b16 %v1041, %v1039
        %v1096 = vpack.c.b16 %v1044, %v1042
        %v1097 = vpack.c.b16 %v1045, %v1043
        %v1098 = vpack.c.b16 %v1048, %v1046
        %v1099 = vpack.c.b16 %v1049, %v1047
        %v1100 = vpack.c.b16 %v1052, %v1050
        %v1101 = vpack.c.b16 %v1053, %v1051
        %v1102 = vpack.c.b16 %v1056, %v1054
        %v1103 = vpack.c.b16 %v1057, %v1055
        %v1104 = vpack.c.b16 %v1060, %v1058
        %v1105 = vpack.c.b16 %v1061, %v1059
        %v1106 = vpack.c.b16 %v1064, %v1062
        %v1107 = vpack.c.b16 %v1065, %v1063
        %v1108 = vpack.c.b16 %v1068, %v1066
        %v1109 = vpack.c.b16 %v1069, %v1067
        %v1110 = vpack.c.b16 %v1072, %v1070
        %v1111 = vpack.c.b16 %v1073, %v1071
        %v1112 = vpack.c.b16 %v1076, %v1074
        %v1113 = vpack.c.b16 %v1077, %v1075
        %v1114 = vpack.c.b16 %v1080, %v1078
        %v1115 = vpack.c.b16 %v1081, %v1079
        %v1116 = vpack.c.b16 %v1084, %v1082
        %v1117 = vpack.c.b16 %v1085, %v1083
        %1150 = vmatprep.subr.bf16.mxu0 %v1087
        %1151 = vmatpush1.bf16.msra.mxu0 %v1086
        %1152 = vmatprep.subr.bf16.mxu0 %v1089
        %1153 = vmatpush1.bf16.msra.mxu0 %v1088
        %1154 = vmatprep.subr.bf16.mxu0 %v1091
        %1155 = vmatpush1.bf16.msra.mxu0 %v1090
        %1156 = vmatprep.subr.bf16.mxu0 %v1093
        %1157 = vmatpush1.bf16.msra.mxu0 %v1092
        %1158 = vmatprep.subr.bf16.mxu0 %v1095
        %1159 = vmatpush1.bf16.msra.mxu0 %v1094
        %1160 = vmatprep.subr.bf16.mxu0 %v1097
        %1161 = vmatpush1.bf16.msra.mxu0 %v1096
        %1162 = vmatprep.subr.bf16.mxu0 %v1099
        %1163 = vmatpush1.bf16.msra.mxu0 %v1098
        %1164 = vmatprep.subr.bf16.mxu0 %v1101
        %1165 = vmatpush1.bf16.msra.mxu0 %v1100
        %1166 = vmatprep.subr.bf16.mxu0 %v1103
        %1167 = vmatpush1.bf16.msra.mxu0 %v1102
        %1168 = vmatprep.subr.bf16.mxu0 %v1105
        %1169 = vmatpush1.bf16.msra.mxu0 %v1104
        %1170 = vmatprep.subr.bf16.mxu0 %v1107
        %1171 = vmatpush1.bf16.msra.mxu0 %v1106
        %1172 = vmatprep.subr.bf16.mxu0 %v1109
        %1173 = vmatpush1.bf16.msra.mxu0 %v1108
        %1174 = vmatprep.subr.bf16.mxu0 %v1111
        %1175 = vmatpush1.bf16.msra.mxu0 %v1110
        %1176 = vmatprep.subr.bf16.mxu0 %v1113
        %1177 = vmatpush1.bf16.msra.mxu0 %v1112
        %1178 = vmatprep.subr.bf16.mxu0 %v1115
        %1179 = vmatpush1.bf16.msra.mxu0 %v1114
        %1180 = vmatprep.subr.bf16.mxu0 %v1117
        %1181 = vmatpush1.bf16.msra.mxu0 %v1116
        %1182 = vmatprep.mubr.bf16.mxu0 %v945
        %1183 = vmatmul.mubr.bf16.gmra.mrb[0].mxu0 %v944
        %v1184 = vpop.f32.mrb[0].mxu0
        %v1185 = vadd.f32 %v983, %v1184
        %v1186 = vpop.f32.mrb[0].mxu0
        %v1187 = vadd.f32 %v987, %v1186
        %v1188 = vpop.f32.mrb[0].mxu0
        %v1189 = vpop.f32.mrb[0].mxu0
        %1190 = vdwg.mxu0
        %1191 = vst [vmem:[%s445] sm:$0xff] %v1185
        %1192 = vst [vmem:[%s445 + $0x8] sm:$0xff] %v1187
        %s1193 = sand.u32 %s274, 1
        %s1194 = scalar_lea.sflag [#allocation4], %s1193
        %s1195 = sand.u32 %s274, 1
        %s1196 = smul.addr %s1195, 16
        %s1197 = scalar_lea.vmem [#allocation10], %s1196
        // Predicated region
        $region81: #{tpu_custom_call.1} parent=63 // pred_check
          %p1198 = pneg %p284
        $region82: #{tpu_custom_call.1} parent=63 // pred_check_branch
          %1200 = sbr.rel (%p1198) target = $region84
        $region83: #{tpu_custom_call.1} parent=63 // pred_region
          %s1202 = ssub.s32 256, 256
          %1203 = vsyncadd %s1194, %s1202
          %s1204 = smul.addr %s30, 2
          %s1205 = smul.addr %s1204, 128
          %s1206 = scalar_lea.hbm %s11, %s1205
          %s1208 = sshll.u32 %s1197, 4
          %s1209 = int_to_ptr.vmem [resolvable:$true] %s1208
          %1211 = dma.vmem_to_hbm [thread:$0]  %s1209, 256, %s1206, %s1194
        $region84: #{tpu_custom_call.1} parent=63 // pred_fallthru
          _
      $region64: #{tpu_custom_call.1} parent=5 // pred_fallthru
        _
      %p1212 = scmp.le.s32.totalorder 2, %s25
      // Predicated region
      $region85: #{tpu_custom_call.1} parent=5 // pred_check
        %p1213 = pneg %p1212
      $region86: #{tpu_custom_call.1} parent=5 // pred_check_branch
        %1215 = sbr.rel (%p1213) target = $region88
      $region87: #{tpu_custom_call.1} parent=5 // pred_region
        %s1216 = ssub.s32 %s25, 2
        // Predicated region
        $region89: #{tpu_custom_call.1} parent=87 // pred_check
          %p1217 = pneg %p290
        $region90: #{tpu_custom_call.1} parent=87 // pred_check_branch
          %1219 = sbr.rel (%p1217) target = $region92
        $region91: #{tpu_custom_call.1} parent=87 // pred_region
          %s1220 = sand.u32 %s275, 1
          %s1221 = scalar_lea.sflag [#allocation4], %s1220
          %s1222 = sand.u32 %s275, 1
          %s1223 = smul.addr %s1222, 16
          %s1224 = scalar_lea.vmem [#allocation10], %s1223
          %1225 = dma.done %s1221, 256
        $region92: #{tpu_custom_call.1} parent=87 // pred_fallthru
          _
      $region88: #{tpu_custom_call.1} parent=5 // pred_fallthru
        _
    $region6: #{tpu_custom_call.1} parent=1 // loop_footer
      %s29 = sadd.s32 1, %s25
    $region7: #{tpu_custom_call.1} parent=1 // loop_footer_branch
      %24 = sbr.rel target = $region3
    $region8: #{tpu_custom_call.1} parent=1 // loop_exit
      _
    %1226 = vsyncpa [#allocation3], 1
    %s1227 = scalar_lea.sflag [#allocation3], 1
    %1228 = vsyncpa %s1227, 1
    %1229 = vsyncpa [#allocation6], 1
    %1230 = vsyncpa [#allocation9], 1
    %1231 = vsyncpa [#allocation4], 1
    %s1232 = scalar_lea.sflag [#allocation4], 1
    %1233 = vsyncpa %s1232, 1

</llo_original>
